<compile_context>
chip_gen: v6e
topology: v6e:2x2x1
jax: 0.10.0
libtpu: 0.0.40
codegen_flags: <defaults>
</compile_context>

<pallas_src>
import math

import jax
import jax.numpy as jnp
from jax import lax
from jax.experimental import pallas as pl
from jax.experimental.pallas import tpu as pltpu

_NEG_BIG = -9000000000000000.0  # matches the PyTorch constant


def _vmem_budget_and_tile_target():
    """Per-chip (vmem_limit_bytes, node-tile target)."""
    cap = None
    try:
        info = pltpu.get_tpu_info()
        cap = getattr(info, "vmem_capacity_bytes", None)
    except Exception:
        cap = None
    if cap is None:
        cap = 64 * 1024 * 1024            # assume v7x-sized VMEM if unknown
    if cap >= 100 * 1024 * 1024:          # v5e / v6e: 128 MiB physical VMEM
        return 100 * 1024 * 1024, 512
    return 48 * 1024 * 1024, 256          # v7x: 64 MiB physical VMEM


def _node_tile_candidates(n, target):
    """Multiple-of-8 divisors of n, <= target, descending; fallback full n."""
    if n <= target:
        return [n]
    cands = [c for c in range(target - target % 8, 7, -8) if n % c == 0]
    return cands if cands else [n]


def _vmem_estimate(bt, tj, n, f_in, f_out, use_scratch):
    adj_tile = 2 * bt * tj * n * 1        # int8 adjT, double-buffered
    h_tile = 2 * bt * tj * f_in * 4       # h j-tile rows, double-buffered
    wh1 = 2 * bt * n * 4                  # resident (Wh @ a1) rows
    w_buf = 2 * f_in * f_out * 4          # W
    out_blk = 2 * bt * n * f_out * 4      # output block (resident across j)
    acc = bt * n * f_out * 4 if use_scratch else 0
    temps = 2 * bt * tj * n * 4           # f32 attention intermediates (e / p)
    return adj_tile + h_tile + wh1 + w_buf + out_blk + acc + temps


def _select_tiles(B, N, F_in, F_out, use_scratch, vmem_limit, tj_target):
    budget = int(0.75 * vmem_limit)
    # bt capped at 2; keep >= 2 steps on the parallel batch axis when possible.
    bt_cands = []
    if B % 2 == 0 and B // 2 >= 2:
        bt_cands.append(2)
    bt_cands.append(1)
    tj_cands = _node_tile_candidates(N, tj_target)
    for tj in tj_cands:                   # biggest j tile first (main lever)
        for bt in bt_cands:
            if _vmem_estimate(bt, tj, N, F_in, F_out, use_scratch) <= budget:
                return bt, tj
    return 1, tj_cands[-1]                # smallest config even if over budget


def _make_gat_kernel(bt, n_j_tiles, alpha, approx_recip, use_scratch, agg_dtype):
    def kernel(wh1_ref, hj_ref, adjt_ref, w_ref, a2_ref, out_ref, *scratch):
        # wh1_ref : (bt, 1, N)   f32   precomputed (Wh @ a1) rows, lane-oriented
        # hj_ref  : (bt, tj, F_in)     rows of h for this j tile
        # adjt_ref: (bt, tj, N)  int8  transposed adjacency tile, adjT[j, i]
        # w_ref   : (F_in, F_out)
        # a2_ref  : (1, F_out)         a[F_out:] as a row
        # out_ref : (bt, N, F_out)     resident across j tiles
        # scratch : optional f32 accumulator (only when out dtype != f32)
        acc = scratch[0] if use_scratch else out_ref
        jt = pl.program_id(1)

        @pl.when(jt == 0)
        def _init():
            acc[...] = jnp.zeros_like(acc)

        w = w_ref[...]
        a2 = a2_ref[...]
        for b in range(bt):  # bt <= 2: bounded static unroll
            whj = jnp.dot(hj_ref[b], w,
                          preferred_element_type=jnp.float32)       # (tj, F_out)
            # Wh @ a2 on the VPU (multiply + lane reduction) -> (tj, 1).
            wh2 = jnp.sum(whj * a2, axis=-1, keepdims=True)
            # e^T[j, i] = Wh2[j] + Wh1[i]; LeakyReLU.
            e = wh2 + wh1_ref[b]                                     # (tj, N)
            e = jnp.where(e > 0, e, alpha * e)
            # Mask non-edges, softmax along the lane axis (== torch dim=1).
            att = jnp.where(adjt_ref[b] != 0, e, _NEG_BIG)
            att = att - jnp.max(att, axis=-1, keepdims=True)
            p = jnp.exp(att)
            denom = jnp.sum(p, axis=-1, keepdims=True)
            p = p * pl.reciprocal(denom, approx=approx_recip)
            # TODO(synk): training-mode attention dropout (pltpu.prng_*);
            # eval-mode F.dropout is the identity.
            # out[i, f] += sum_j attT[j, i] * Whj[j, f] (MXU, contract dim 0;
            # bf16 operands, f32 accumulation).
            contrib = lax.dot_general(
                p.astype(agg_dtype), whj.astype(agg_dtype),
                (((0,), (0,)), ((), ())),
                preferred_element_type=jnp.float32)
            acc[b] = acc[b] + contrib.astype(acc.dtype)

        if use_scratch:
            @pl.when(jt == n_j_tiles - 1)
            def _flush():
                out_ref[...] = acc[...].astype(out_ref.dtype)

    return kernel


def graph_attention_forward(h, adj, W, a, *, alpha=0.2,
                            batch_block=None, node_block=None,
                            approx_recip=True, agg_dtype=jnp.bfloat16):
    """GAT forward. h: (B,N,F_in), adj: (B,N,N), W: (F_in,F_out), a: (2*F_out,1)."""
    B, N, F_in = h.shape
    F_out = W.shape[1]
    out_dtype = h.dtype

    vmem_limit, tj_target = _vmem_budget_and_tile_target()
    # Accumulate directly into the resident f32 output block; use a separate
    # f32 scratch accumulator only for narrower output dtypes.
    use_scratch = out_dtype != jnp.float32

    bt_auto, tj_auto = _select_tiles(B, N, F_in, F_out, use_scratch,
                                     vmem_limit, tj_target)
    bt = batch_block if batch_block is not None else bt_auto
    tj = node_block if node_block is not None else tj_auto
    assert B % bt == 0, (B, bt)
    assert N % tj == 0, (N, tj)
    n_j_tiles = N // tj

    # adj only matters as `> 0`: fuse the transpose with the int8 downcast in
    # one wrapper XLA op (extra HBM write is B*N^2*1B, kernel stream 4x
    # narrower).  adjT[b, j, i] = (adj[b, i, j] > 0).
    adjt = jnp.swapaxes((adj > 0).astype(jnp.int8), 1, 2)

    # Wh @ a1 == h @ (W @ a1): tiny wrapper matvec producing the lane-oriented
    # (B, 1, N) rows so the kernel never needs all of h resident in VMEM.
    wa1 = jnp.reshape(W @ a[:F_out], (F_in,))
    wh1 = jnp.einsum("bnf,f->bn", h, wa1).astype(jnp.float32).reshape(B, 1, N)
    a2_row = jnp.reshape(a[F_out:, 0], (1, F_out))

    in_specs = [
        pl.BlockSpec((bt, 1, N), lambda b, j: (b, 0, 0)),       # Wh@a1 rows (resident)
        pl.BlockSpec((bt, tj, F_in), lambda b, j: (b, j, 0)),   # h, j-tile rows
        pl.BlockSpec((bt, tj, N), lambda b, j: (b, j, 0)),      # adjT int8 tile
        pl.BlockSpec((F_in, F_out), lambda b, j: (0, 0)),       # W (shared)
        pl.BlockSpec((1, F_out), lambda b, j: (0, 0)),          # a2 row
    ]
    scratch_shapes = ([pltpu.VMEM((bt, N, F_out), jnp.float32)]
                      if use_scratch else [])

    grid_spec = pltpu.PrefetchScalarGridSpec(
        num_scalar_prefetch=0,
        grid=(B // bt, n_j_tiles),
        in_specs=in_specs,
        out_specs=pl.BlockSpec((bt, N, F_out), lambda b, j: (b, 0, 0)),
        scratch_shapes=scratch_shapes,
    )

    kernel = _make_gat_kernel(bt, n_j_tiles, alpha, approx_recip,
                              use_scratch, agg_dtype)
    return pl.pallas_call(
        kernel,
        out_shape=jax.ShapeDtypeStruct((B, N, F_out), out_dtype),
        grid_spec=grid_spec,
        compiler_params=pltpu.CompilerParams(
            # Batch tiles are independent (megacore-parallel); the j axis
            # carries the output accumulator -> "arbitrary".
            dimension_semantics=("parallel", "arbitrary"),
            vmem_limit_bytes=vmem_limit,
        ),
    )(wh1, h, adjt, W, a2_row)


def _xavier_uniform(key, shape, dtype=jnp.float32):
    fan_in, fan_out = shape[0], shape[1]
    bound = math.sqrt(6.0 / (fan_in + fan_out))
    return jax.random.uniform(key, shape, dtype, minval=-bound, maxval=bound)


def _reference(h, adj, W, a, alpha=0.2):
    F_out = W.shape[1]
    Wh = jnp.einsum("bnf,fo->bno", h, W)
    Wh1 = jnp.einsum("bno,ok->bnk", Wh, a[:F_out])          # (B, N, 1)
    Wh2 = jnp.einsum("bno,ok->bnk", Wh, a[F_out:])          # (B, N, 1)
    e = Wh1 + jnp.swapaxes(Wh2, 1, 2)                       # (B, N, N)
    e = jnp.where(e > 0, e, alpha * e)
    att = jnp.where(adj > 0, e, jnp.full_like(e, _NEG_BIG))
    att = jax.nn.softmax(att, axis=1)
    return jnp.einsum("bij,bjo->bio", att, Wh)


if __name__ == "__main__":
    key = jax.random.PRNGKey(0)
    kW, ka, kh, kadj = jax.random.split(key, 4)

    B, N, F_in, F_out = 2, 16, 32, 32

    W = _xavier_uniform(kW, (F_in, F_out))
    a = _xavier_uniform(ka, (2 * F_out, 1))
    h = jax.random.normal(kh, (B, N, F_in), dtype=jnp.float32)
    # Random binary adjacency (with self-loops so every softmax column has an edge).
    adj = (jax.random.uniform(kadj, (B, N, N)) > 0.5).astype(jnp.float32)
    adj = jnp.maximum(adj, jnp.eye(N, dtype=jnp.float32)[None])

    out = jax.block_until_ready(graph_attention_forward(h, adj, W, a))
    ref = _reference(h, adj, W, a)

    assert out.shape == (B, N, F_out)
    # Tolerance covers the approx (EUP) reciprocal in the softmax denominator
    # and the bf16 operands of the aggregation matmul (f32 accumulation).
    assert jnp.allclose(out, ref, atol=3e-2, rtol=3e-2), (
        f"max abs err {jnp.max(jnp.abs(out - ref))}"
    )
    print("KERNEL_OK")
</pallas_src>

<mosaic_0001>
module attributes {stable_mosaic.version = 11 : i64} {
  func.func @kernel(%arg0: i32, %arg1: i32, %arg2: memref<1x1x16xf32, #tpu.memory_space<vmem>>, %arg3: memref<1x16x32xf32, #tpu.memory_space<vmem>>, %arg4: memref<1x16x16xi8, #tpu.memory_space<vmem>>, %arg5: memref<32x32xf32, #tpu.memory_space<vmem>>, %arg6: memref<1x32xf32, #tpu.memory_space<vmem>>, %arg7: memref<1x16x32xf32, #tpu.memory_space<vmem>>) attributes {dimension_semantics = [#tpu.dimension_semantics<parallel>, #tpu.dimension_semantics<arbitrary>], iteration_bounds = array<i64: 2, 1>, scalar_prefetch = 0 : i64, scratch_operands = 0 : i64, tpu.core_type = #tpu.core_type<tc>, window_params = [{transform_indices = @transform_0, window_bounds = array<i64: 1, 1, 16>}, {transform_indices = @transform_1, window_bounds = array<i64: 1, 16, 32>}, {transform_indices = @transform_2, window_bounds = array<i64: 1, 16, 16>}, {pipeline_mode = #tpu.pipeline_mode<synchronous>, transform_indices = @transform_3, window_bounds = array<i64: 32, 32>}, {pipeline_mode = #tpu.pipeline_mode<synchronous>, transform_indices = @transform_4, window_bounds = array<i64: 1, 32>}, {transform_indices = @transform_5, window_bounds = array<i64: 1, 16, 32>}]} {
    %c0_i32 = arith.constant 0 : i32
    %0 = arith.cmpi eq, %arg1, %c0_i32 : i32
    %1 = arith.extui %0 : i1 to i32
    %c0_i32_0 = arith.constant 0 : i32
    %2 = arith.cmpi ne, %1, %c0_i32_0 : i32
    scf.if %2 {
      %cst_26 = arith.constant 0.000000e+00 : f32
      %47 = vector.broadcast %cst_26 : f32 to vector<1x16x32xf32>
      %c0_27 = arith.constant 0 : index
      %c0_28 = arith.constant 0 : index
      %c0_29 = arith.constant 0 : index
      %48 = vector.load %arg7[%c0_27, %c0_28, %c0_29] : memref<1x16x32xf32, #tpu.memory_space<vmem>>, vector<1x16x32xf32>
      tpu.vector_store %arg7[%c0_27, %c0_28, %c0_29], %47 {strides = array<i32>} : memref<1x16x32xf32, #tpu.memory_space<vmem>>, vector<1x16x32xf32>,
    } else {
    }
    %c0 = arith.constant 0 : index
    %c0_1 = arith.constant 0 : index
    %3 = vector.load %arg5[%c0, %c0_1] : memref<32x32xf32, #tpu.memory_space<vmem>>, vector<32x32xf32>
    %c0_2 = arith.constant 0 : index
    %c0_3 = arith.constant 0 : index
    %4 = vector.load %arg6[%c0_2, %c0_3] : memref<1x32xf32, #tpu.memory_space<vmem>>, vector<1x32xf32>
    %c0_4 = arith.constant 0 : index
    %c0_5 = arith.constant 0 : index
    %c0_6 = arith.constant 0 : index
    %5 = vector.load %arg3[%c0_4, %c0_5, %c0_6] : memref<1x16x32xf32, #tpu.memory_space<vmem>>, vector<1x16x32xf32>
    %6 = vector.shape_cast %5 : vector<1x16x32xf32> to vector<16x32xf32>
    %cst = arith.constant dense<0.000000e+00> : vector<16x32xf32>
    %7 = tpu.matmul %6, %3, %cst {dimension_numbers = #tpu.dot_dimension_numbers<[1], [0], [0], [1], [0, 0, 1, 1], [], []>} : vector<16x32xf32>, vector<32x32xf32>, vector<16x32xf32> -> vector<16x32xf32>
    %8 = vector.broadcast %4 : vector<1x32xf32> to vector<16x32xf32>
    %9 = arith.mulf %7, %8 : vector<16x32xf32>
    %cst_7 = arith.constant dense<0.000000e+00> : vector<16xf32>
    %10 = vector.multi_reduction <add>, %9, %cst_7 [1] : vector<16x32xf32> to vector<16xf32>
    %11 = vector.shape_cast %10 : vector<16xf32> to vector<16x1xf32>
    %c0_8 = arith.constant 0 : index
    %c0_9 = arith.constant 0 : index
    %c0_10 = arith.constant 0 : index
    %12 = vector.load %arg2[%c0_8, %c0_9, %c0_10] : memref<1x1x16xf32, #tpu.memory_space<vmem>>, vector<1x1x16xf32>
    %13 = vector.shape_cast %12 : vector<1x1x16xf32> to vector<1x16xf32>
    %14 = vector.broadcast %11 : vector<16x1xf32> to vector<16x16xf32>
    %15 = vector.broadcast %13 : vector<1x16xf32> to vector<16x16xf32>
    %16 = arith.addf %14, %15 : vector<16x16xf32>
    %cst_11 = arith.constant 0.000000e+00 : f32
    %17 = vector.broadcast %cst_11 : f32 to vector<16x16xf32>
    %18 = arith.cmpf ogt, %16, %17 : vector<16x16xf32>
    %cst_12 = arith.constant 2.000000e-01 : f32
    %19 = vector.broadcast %cst_12 : f32 to vector<16x16xf32>
    %20 = arith.mulf %19, %16 : vector<16x16xf32>
    %21 = arith.select %18, %16, %20 : vector<16x16xi1>, vector<16x16xf32>
    %c0_13 = arith.constant 0 : index
    %c0_14 = arith.constant 0 : index
    %c0_15 = arith.constant 0 : index
    %22 = vector.load %arg4[%c0_13, %c0_14, %c0_15] : memref<1x16x16xi8, #tpu.memory_space<vmem>>, vector<1x16x16xi8>
    %23 = vector.shape_cast %22 : vector<1x16x16xi8> to vector<16x16xi8>
    %c0_i8 = arith.constant 0 : i8
    %24 = vector.broadcast %c0_i8 : i8 to vector<16x16xi8>
    %25 = arith.cmpi ne, %23, %24 : vector<16x16xi8>
    %cst_16 = arith.constant -9.000000e+15 : f32
    %26 = vector.broadcast %cst_16 : f32 to vector<16x16xf32>
    %27 = arith.select %25, %21, %26 : vector<16x16xi1>, vector<16x16xf32>
    %cst_17 = arith.constant dense<0xFF800000> : vector<16xf32>
    %28 = vector.multi_reduction <maximumf>, %27, %cst_17 [1] : vector<16x16xf32> to vector<16xf32>
    %29 = vector.shape_cast %28 : vector<16xf32> to vector<16x1xf32>
    %30 = vector.broadcast %29 : vector<16x1xf32> to vector<16x16xf32>
    %31 = arith.subf %27, %30 : vector<16x16xf32>
    %32 = math.exp %31 : vector<16x16xf32>
    %cst_18 = arith.constant dense<0.000000e+00> : vector<16xf32>
    %33 = vector.multi_reduction <add>, %32, %cst_18 [1] : vector<16x16xf32> to vector<16xf32>
    %34 = vector.shape_cast %33 : vector<16xf32> to vector<16x1xf32>
    %35 = tpu.reciprocal %34 {approx = true} : vector<16x1xf32> -> vector<16x1xf32>
    %36 = vector.broadcast %35 : vector<16x1xf32> to vector<16x16xf32>
    %37 = arith.mulf %32, %36 : vector<16x16xf32>
    %38 = arith.truncf %37 : vector<16x16xf32> to vector<16x16xbf16>
    %39 = arith.truncf %7 : vector<16x32xf32> to vector<16x32xbf16>
    %cst_19 = arith.constant dense<0.000000e+00> : vector<16x32xf32>
    %40 = tpu.matmul %38, %39, %cst_19 {dimension_numbers = #tpu.dot_dimension_numbers<[0], [0], [1], [1], [0, 1, 1, 1], [], []>} : vector<16x16xbf16>, vector<16x32xbf16>, vector<16x32xf32> -> vector<16x32xf32>
    %c0_20 = arith.constant 0 : index
    %c0_21 = arith.constant 0 : index
    %c0_22 = arith.constant 0 : index
    %41 = vector.load %arg7[%c0_20, %c0_21, %c0_22] : memref<1x16x32xf32, #tpu.memory_space<vmem>>, vector<1x16x32xf32>
    %42 = vector.shape_cast %41 : vector<1x16x32xf32> to vector<16x32xf32>
    %43 = arith.addf %42, %40 : vector<16x32xf32>
    %c0_23 = arith.constant 0 : index
    %c0_24 = arith.constant 0 : index
    %c0_25 = arith.constant 0 : index
    %44 = vector.load %arg7[%c0_23, %c0_24, %c0_25] : memref<1x16x32xf32, #tpu.memory_space<vmem>>, vector<1x16x32xf32>
    %45 = vector.shape_cast %44 : vector<1x16x32xf32> to vector<16x32xf32>
    %46 = vector.shape_cast %43 : vector<16x32xf32> to vector<1x16x32xf32>
    tpu.vector_store %arg7[%c0_23, %c0_24, %c0_25], %46 {strides = array<i32>} : memref<1x16x32xf32, #tpu.memory_space<vmem>>, vector<1x16x32xf32>,
    return
  }
  func.func @transform_0(%arg0: i32, %arg1: i32) -> (i32, i32, i32) {
    %c0_i32 = arith.constant 0 : i32
    %c0_i32_0 = arith.constant 0 : i32
    %c0_i32_1 = arith.constant 0 : i32
    return %arg0, %c0_i32, %c0_i32_0 : i32, i32, i32
  }
  func.func @transform_1(%arg0: i32, %arg1: i32) -> (i32, i32, i32) {
    %c0_i32 = arith.constant 0 : i32
    %c0_i32_0 = arith.constant 0 : i32
    return %arg0, %arg1, %c0_i32 : i32, i32, i32
  }
  func.func @transform_2(%arg0: i32, %arg1: i32) -> (i32, i32, i32) {
    %c0_i32 = arith.constant 0 : i32
    %c0_i32_0 = arith.constant 0 : i32
    return %arg0, %arg1, %c0_i32 : i32, i32, i32
  }
  func.func @transform_3(%arg0: i32, %arg1: i32) -> (i32, i32) {
    %c0_i32 = arith.constant 0 : i32
    %c0_i32_0 = arith.constant 0 : i32
    %c0_i32_1 = arith.constant 0 : i32
    return %c0_i32, %c0_i32_0 : i32, i32
  }
  func.func @transform_4(%arg0: i32, %arg1: i32) -> (i32, i32) {
    %c0_i32 = arith.constant 0 : i32
    %c0_i32_0 = arith.constant 0 : i32
    %c0_i32_1 = arith.constant 0 : i32
    return %c0_i32, %c0_i32_0 : i32, i32
  }
  func.func @transform_5(%arg0: i32, %arg1: i32) -> (i32, i32, i32) {
    %c0_i32 = arith.constant 0 : i32
    %c0_i32_0 = arith.constant 0 : i32
    %c0_i32_1 = arith.constant 0 : i32
    return %arg0, %c0_i32, %c0_i32_0 : i32, i32, i32
  }
}

</mosaic_0001>

<llo_original>
// kernel: tpu_custom_call.1
$region0: #{tpu_custom_call.1}
  #allocation0 [shape = 'u32[]', space=smem, size = 0x4, offset = 0x4, fixed_abs, tag = 'smem constant byte address 0x4 - core index']
  #allocation1 [shape = 'u32[144,128]{1,0:T(1,128)}', space=vmem, size = 0x12000, scoped, tag = 'internal scratch']
  %s0 = inlined_call_operand.hbm [shape: f32[2,1,16], index: 0, kind: input, shape index: {}]
  %s1 = inlined_call_operand.hbm [shape: f32[2,16,32], index: 1, kind: input, shape index: {}]
  %s2 = inlined_call_operand.hbm [shape: s8[2,16,16], index: 2, kind: input, shape index: {}]
  %s3 = inlined_call_operand.hbm [shape: f32[32,32], index: 3, kind: input, shape index: {}]
  %s4 = inlined_call_operand.vmem [shape: f32[1,32], index: 4, kind: input, shape index: {}]
  %s5 = inlined_call_operand.hbm [shape: f32[2,16,32], index: 5, kind: output, shape index: {}]
  %s6 = sld [smem:[#allocation0]]
  $region73: #{tpu_custom_call.1} parent=0
    _
  %s8 = ssub.s32 1, %s6
  %s9 = scalar_select 0, %s8, %s6
  $region1: #{tpu_custom_call.1} parent=0
    #allocation2 [shape = 'u8[1024]{0}', space=vmem, size = 0x400, scoped, tag = 'input window, operand 0']
    #allocation3 [shape = 's32[2]{0}', space=sflag, size = 0x8, scoped, tag = 'scoped memory for tpu_custom_call.1']
    #allocation4 [shape = 's32[2]{0}', space=sflag, size = 0x8, scoped, tag = 'scoped memory for tpu_custom_call.1']
    #allocation5 [shape = 'u8[16384]{0}', space=vmem, size = 0x4000, scoped, tag = 'input window, operand 1']
    #allocation6 [shape = 's32[2]{0}', space=sflag, size = 0x8, scoped, tag = 'scoped memory for tpu_custom_call.1']
    #allocation7 [shape = 'u8[4096]{0}', space=vmem, size = 0x1000, scoped, tag = 'input window, operand 2']
    #allocation8 [shape = 'u8[16384]{0}', space=vmem, size = 0x4000, scoped, tag = 'input window, operand 3, single buffered']
    #allocation9 [shape = 's32[1]{0}', space=sflag, size = 0x4, scoped, tag = 'scoped memory for tpu_custom_call.1']
    #allocation10 [shape = 'u8[16384]{0}', space=vmem, size = 0x4000, scoped, tag = 'output window, operand 0']
    %10 = vsyncpa [#allocation3], 0
    %s11 = scalar_lea.sflag [#allocation3], 1
    %12 = vsyncpa %s11, 0
    %13 = vsyncpa [#allocation6], 0
    %s14 = scalar_lea.sflag [#allocation6], 1
    %15 = vsyncpa %s14, 0
    %16 = vsyncpa [#allocation9], 0
    %17 = vsyncpa [#allocation4], 0
    %s18 = scalar_lea.sflag [#allocation4], 1
    %19 = vsyncpa %s18, 0
    loop: start=0, step=1, limit=4
    $region2: #{tpu_custom_call.1} parent=1 // loop_pre_header
      _
    $region3: #{tpu_custom_call.1} parent=1 // loop_header
      %s21 = sphi 0, %s25
      %p22 = scmp.ge.s32.totalorder %s21, 4
      %s28 = sphi 0, %s40
      %s29 = sphi 0, %s36
      %s30 = sphi 0, %s28
      %s31 = sphi 0, %s29
      %s32 = sphi 0, %s30
      %s33 = sphi 0, %s31
      %s43 = sphi 0, %s45
      %s46 = sphi 0, %s43
      %s47 = sphi 0, %s46
      %s63 = sphi 0, %s47
      %s71 = sphi 0, %s73
      %s74 = sphi 0, %s71
      %s75 = sphi 0, %s74
      %s91 = sphi 0, %s75
      %s99 = sphi 0, %s101
      %s102 = sphi 0, %s99
      %s103 = sphi 0, %s102
      %s119 = sphi 0, %s103
      %s123 = sphi 0, %s123
      %s125 = sphi 0, %s123
      %s126 = sphi 0, %s125
      %s140 = sphi 0, %s126
      %s144 = sphi 0, %s144
      %s146 = sphi 0, %s144
      %s147 = sphi 0, %s146
      %s161 = sphi 0, %s147
      %s167 = sphi 0, %s169
      %s170 = sphi 0, %s167
      %s171 = sphi 0, %s170
      %s187 = sphi 0, %s171
    $region4: #{tpu_custom_call.1} parent=1 // loop_header_branch
      %24 = sbr.rel (%p22) target = $region8
    $region5: #{tpu_custom_call.1} parent=1 // loop_body
      %s26 = ssub.s32 %s21, 1
      %s27 = ssub.s32 %s21, 2
      %s34 = sadd.s32 1, %s29
      %p35 = scmp.ge.s32.totalorder %s34, 1
      %s36 = scalar_select %p35, 0, %s34
      %s37 = sadd.s32 1, %s28
      %s38 = scalar_select %p35, %s37, %s28
      %p39 = scmp.ge.s32.totalorder %s38, 2
      %s40 = scalar_select %p39, 0, %s38
      %s41 = ssub.s32 %s28, %s40
      %p42 = scmp.eq.s32.totalorder %s41, 0
      %s44 = sadd.s32 %s43, 1
      %s45 = scalar_select %p42, %s43, %s44
      %p48 = pneg %p42
      %p49 = scmp.eq.s32.totalorder %s21, 1
      %p50 = por %p48, %p49
      %p51 = scmp.ne.s32.totalorder %s43, %s46
      %p52 = scmp.eq.s32.totalorder %s21, 0
      %p53 = por %p51, %p52
      %p54 = scmp.ne.s32.totalorder %s43, %s46
      %p55 = scmp.eq.s32.totalorder %s26, 1
      %p56 = por %p54, %p55
      %p57 = scmp.ne.s32.totalorder %s46, %s47
      %p58 = scmp.eq.s32.totalorder %s26, 0
      %p59 = por %p57, %p58
      %p60 = scmp.ne.s32.totalorder %s46, %s47
      %p61 = scmp.eq.s32.totalorder %s27, 1
      %p62 = por %p60, %p61
      %p64 = scmp.ne.s32.totalorder %s47, %s63
      %p65 = scmp.eq.s32.totalorder %s27, 0
      %p66 = por %p64, %p65
      %s67 = ssub.s32 %s28, %s40
      %s68 = ssub.s32 %s29, %s36
      %s69 = sor.u32 %s67, %s68
      %p70 = scmp.eq.s32.totalorder %s69, 0
      %s72 = sadd.s32 %s71, 1
      %s73 = scalar_select %p70, %s71, %s72
      %p76 = pneg %p70
      %p77 = scmp.eq.s32.totalorder %s21, 1
      %p78 = por %p76, %p77
      %p79 = scmp.ne.s32.totalorder %s71, %s74
      %p80 = scmp.eq.s32.totalorder %s21, 0
      %p81 = por %p79, %p80
      %p82 = scmp.ne.s32.totalorder %s71, %s74
      %p83 = scmp.eq.s32.totalorder %s26, 1
      %p84 = por %p82, %p83
      %p85 = scmp.ne.s32.totalorder %s74, %s75
      %p86 = scmp.eq.s32.totalorder %s26, 0
      %p87 = por %p85, %p86
      %p88 = scmp.ne.s32.totalorder %s74, %s75
      %p89 = scmp.eq.s32.totalorder %s27, 1
      %p90 = por %p88, %p89
      %p92 = scmp.ne.s32.totalorder %s75, %s91
      %p93 = scmp.eq.s32.totalorder %s27, 0
      %p94 = por %p92, %p93
      %s95 = ssub.s32 %s28, %s40
      %s96 = ssub.s32 %s29, %s36
      %s97 = sor.u32 %s95, %s96
      %p98 = scmp.eq.s32.totalorder %s97, 0
      %s100 = sadd.s32 %s99, 1
      %s101 = scalar_select %p98, %s99, %s100
      %p104 = pneg %p98
      %p105 = scmp.eq.s32.totalorder %s21, 1
      %p106 = por %p104, %p105
      %p107 = scmp.ne.s32.totalorder %s99, %s102
      %p108 = scmp.eq.s32.totalorder %s21, 0
      %p109 = por %p107, %p108
      %p110 = scmp.ne.s32.totalorder %s99, %s102
      %p111 = scmp.eq.s32.totalorder %s26, 1
      %p112 = por %p110, %p111
      %p113 = scmp.ne.s32.totalorder %s102, %s103
      %p114 = scmp.eq.s32.totalorder %s26, 0
      %p115 = por %p113, %p114
      %p116 = scmp.ne.s32.totalorder %s102, %s103
      %p117 = scmp.eq.s32.totalorder %s27, 1
      %p118 = por %p116, %p117
      %p120 = scmp.ne.s32.totalorder %s103, %s119
      %p121 = scmp.eq.s32.totalorder %s27, 0
      %p122 = por %p120, %p121
      %s124 = sadd.s32 %s123, 1
      %p127 = scmp.eq.s32.totalorder %s21, 1
      %p128 = scmp.ne.s32.totalorder %s123, %s125
      %p129 = scmp.eq.s32.totalorder %s21, 0
      %p130 = por %p128, %p129
      %p131 = scmp.ne.s32.totalorder %s123, %s125
      %p132 = scmp.eq.s32.totalorder %s26, 1
      %p133 = por %p131, %p132
      %p134 = scmp.ne.s32.totalorder %s125, %s126
      %p135 = scmp.eq.s32.totalorder %s26, 0
      %p136 = por %p134, %p135
      %p137 = scmp.ne.s32.totalorder %s125, %s126
      %p138 = scmp.eq.s32.totalorder %s27, 1
      %p139 = por %p137, %p138
      %p141 = scmp.ne.s32.totalorder %s126, %s140
      %p142 = scmp.eq.s32.totalorder %s27, 0
      %p143 = por %p141, %p142
      %s145 = sadd.s32 %s144, 1
      %p148 = scmp.eq.s32.totalorder %s21, 1
      %p149 = scmp.ne.s32.totalorder %s144, %s146
      %p150 = scmp.eq.s32.totalorder %s21, 0
      %p151 = por %p149, %p150
      %p152 = scmp.ne.s32.totalorder %s144, %s146
      %p153 = scmp.eq.s32.totalorder %s26, 1
      %p154 = por %p152, %p153
      %p155 = scmp.ne.s32.totalorder %s146, %s147
      %p156 = scmp.eq.s32.totalorder %s26, 0
      %p157 = por %p155, %p156
      %p158 = scmp.ne.s32.totalorder %s146, %s147
      %p159 = scmp.eq.s32.totalorder %s27, 1
      %p160 = por %p158, %p159
      %p162 = scmp.ne.s32.totalorder %s147, %s161
      %p163 = scmp.eq.s32.totalorder %s27, 0
      %p164 = por %p162, %p163
      %s165 = ssub.s32 %s28, %s40
      %p166 = scmp.eq.s32.totalorder %s165, 0
      %s168 = sadd.s32 %s167, 1
      %s169 = scalar_select %p166, %s167, %s168
      %p172 = pneg %p166
      %p173 = scmp.eq.s32.totalorder %s21, 1
      %p174 = por %p172, %p173
      %p175 = scmp.ne.s32.totalorder %s167, %s170
      %p176 = scmp.eq.s32.totalorder %s21, 0
      %p177 = por %p175, %p176
      %p178 = scmp.ne.s32.totalorder %s167, %s170
      %p179 = scmp.eq.s32.totalorder %s26, 1
      %p180 = por %p178, %p179
      %p181 = scmp.ne.s32.totalorder %s170, %s171
      %p182 = scmp.eq.s32.totalorder %s26, 0
      %p183 = por %p181, %p182
      %p184 = scmp.ne.s32.totalorder %s170, %s171
      %p185 = scmp.eq.s32.totalorder %s27, 1
      %p186 = por %p184, %p185
      %p188 = scmp.ne.s32.totalorder %s171, %s187
      %p189 = scmp.eq.s32.totalorder %s27, 0
      %p190 = por %p188, %p189
      %p191 = scmp.le.s32.totalorder 1, %s21
      %p192 = scmp.lt.s32.totalorder %s21, 3
      %p193 = pnand %p191, %p192
      %p194 = pneg %p193
      // Predicated region
      $region9: #{tpu_custom_call.1} parent=5 // pred_check
        _
      $region10: #{tpu_custom_call.1} parent=5 // pred_check_branch
        %196 = sbr.rel (%p193) target = $region12
      $region11: #{tpu_custom_call.1} parent=5 // pred_region
        %s197 = ssub.s32 %s21, 1
        // Predicated region
        $region13: #{tpu_custom_call.1} parent=11 // pred_check
          %p198 = pneg %p136
        $region14: #{tpu_custom_call.1} parent=11 // pred_check_branch
          %200 = sbr.rel (%p198) target = $region16
        $region15: #{tpu_custom_call.1} parent=11 // pred_region
          %s202 = ssub.s32 512, 512
          %203 = vsyncadd [#allocation9], %s202
          %s204 = sshll.u32 [#allocation8], 4
          %s205 = int_to_ptr.vmem [resolvable:$true] %s204
          %210 = dma.hbm_to_vmem [thread:$0]  %s3, 512, %s205, [#allocation9], 128, 128, 8
        $region16: #{tpu_custom_call.1} parent=11 // pred_fallthru
          _
        // Predicated region
        $region17: #{tpu_custom_call.1} parent=11 // pred_check
          %p211 = pneg %p157
        $region18: #{tpu_custom_call.1} parent=11 // pred_check_branch
          %213 = sbr.rel (%p211) target = $region20
        $region19: #{tpu_custom_call.1} parent=11 // pred_region
          _
        $region20: #{tpu_custom_call.1} parent=11 // pred_fallthru
          _
      $region12: #{tpu_custom_call.1} parent=5 // pred_fallthru
        _
      %p214 = scmp.lt.s32.totalorder %s21, 2
      // Predicated region
      $region21: #{tpu_custom_call.1} parent=5 // pred_check
        %p215 = pneg %p214
      $region22: #{tpu_custom_call.1} parent=5 // pred_check_branch
        %217 = sbr.rel (%p215) target = $region24
      $region23: #{tpu_custom_call.1} parent=5 // pred_region
        // Predicated region
        $region25: #{tpu_custom_call.1} parent=23 // pred_check
          %p218 = pneg %p53
        $region26: #{tpu_custom_call.1} parent=23 // pred_check_branch
          %220 = sbr.rel (%p218) target = $region28
        $region27: #{tpu_custom_call.1} parent=23 // pred_region
          %s221 = sand.u32 %s43, 1
          %s222 = scalar_lea.sflag [#allocation3], %s221
          %s223 = sand.u32 %s43, 1
          %s224 = scalar_lea.vmem [#allocation2], %s223
          %s226 = ssub.s32 16, 16
          %227 = vsyncadd %s222, %s226
          %s228 = smul.addr %s28, 16
          %s229 = scalar_lea.hbm %s0, %s228
          %s231 = sshll.u32 %s224, 4
          %s232 = int_to_ptr.vmem [resolvable:$true] %s231
          %234 = dma.hbm_to_vmem [thread:$0]  %s229, 16, %s232, %s222
        $region28: #{tpu_custom_call.1} parent=23 // pred_fallthru
          _
        // Predicated region
        $region29: #{tpu_custom_call.1} parent=23 // pred_check
          %p235 = pneg %p81
        $region30: #{tpu_custom_call.1} parent=23 // pred_check_branch
          %237 = sbr.rel (%p235) target = $region32
        $region31: #{tpu_custom_call.1} parent=23 // pred_region
          %s238 = sand.u32 %s21, 1
          %s239 = scalar_lea.sflag [#allocation6], %s238
          %s240 = sand.u32 %s71, 1
          %s241 = smul.addr %s240, 16
          %s242 = scalar_lea.vmem [#allocation5], %s241
          %s243 = smul.u32 2, %s29
          %s245 = ssub.s32 256, 256
          %246 = vsyncadd %s239, %s245
          %s247 = smul.addr %s28, 2
          %s248 = sadd.s32 %s243, %s247
          %s249 = smul.addr %s248, 128
          %s250 = scalar_lea.hbm %s1, %s249
          %s251 = sshll.u32 %s242, 4
          %s252 = int_to_ptr.vmem [resolvable:$true] %s251
          %257 = dma.hbm_to_vmem [thread:$0]  %s250, 256, %s252, %s239, 128, 128, 8
        $region32: #{tpu_custom_call.1} parent=23 // pred_fallthru
          _
        // Predicated region
        $region33: #{tpu_custom_call.1} parent=23 // pred_check
          %p258 = pneg %p109
        $region34: #{tpu_custom_call.1} parent=23 // pred_check_branch
          %260 = sbr.rel (%p258) target = $region36
        $region35: #{tpu_custom_call.1} parent=23 // pred_region
          %s261 = sand.u32 %s21, 1
          %s262 = scalar_lea.sflag [#allocation6], %s261
          %s263 = sand.u32 %s99, 1
          %s264 = smul.addr %s263, 4
          %s265 = scalar_lea.vmem [#allocation7], %s264
          %s266 = smul.u32 2, %s29
          %s268 = ssub.s32 64, 64
          %269 = vsyncadd %s262, %s268
          %s270 = smul.addr %s28, 2
          %s271 = sadd.s32 %s266, %s270
          %s272 = smul.addr %s271, 32
          %s273 = scalar_lea.hbm %s2, %s272
          %s274 = sshll.u32 %s265, 4
          %s275 = int_to_ptr.vmem [resolvable:$true] %s274
          %280 = dma.hbm_to_vmem [thread:$0]  %s273, 64, %s275, %s262, 32, 32, 2
        $region36: #{tpu_custom_call.1} parent=23 // pred_fallthru
          _
      $region24: #{tpu_custom_call.1} parent=5 // pred_fallthru
        _
      %p281 = scmp.le.s32.totalorder 1, %s21
      %p282 = scmp.lt.s32.totalorder %s21, 3
      %p283 = pnand %p281, %p282
      %p284 = pneg %p283
      // Predicated region
      $region37: #{tpu_custom_call.1} parent=5 // pred_check
        _
      $region38: #{tpu_custom_call.1} parent=5 // pred_check_branch
        %286 = sbr.rel (%p283) target = $region40
      $region39: #{tpu_custom_call.1} parent=5 // pred_region
        %s287 = ssub.s32 %s21, 1
        %s288 = sand.u32 %s46, 1
        %s289 = scalar_lea.sflag [#allocation3], %s288
        %s290 = sand.u32 %s46, 1
        %s291 = scalar_lea.vmem [#allocation2], %s290
        // Predicated region
        $region41: #{tpu_custom_call.1} parent=39 // pred_check
          %p292 = pneg %p59
        $region42: #{tpu_custom_call.1} parent=39 // pred_check_branch
          %294 = sbr.rel (%p292) target = $region44
        $region43: #{tpu_custom_call.1} parent=39 // pred_region
          %295 = dma.done %s289, 16
        $region44: #{tpu_custom_call.1} parent=39 // pred_fallthru
          _
        %s296 = sand.u32 %s26, 1
        %s297 = scalar_lea.sflag [#allocation6], %s296
        %s298 = sand.u32 %s74, 1
        %s299 = smul.addr %s298, 16
        %s300 = scalar_lea.vmem [#allocation5], %s299
        // Predicated region
        $region45: #{tpu_custom_call.1} parent=39 // pred_check
          %p301 = pneg %p87
        $region46: #{tpu_custom_call.1} parent=39 // pred_check_branch
          %303 = sbr.rel (%p301) target = $region48
        $region47: #{tpu_custom_call.1} parent=39 // pred_region
          %304 = dma.done %s297, 256
        $region48: #{tpu_custom_call.1} parent=39 // pred_fallthru
          _
        %s305 = sand.u32 %s26, 1
        %s306 = scalar_lea.sflag [#allocation6], %s305
        %s307 = sand.u32 %s102, 1
        %s308 = smul.addr %s307, 4
        %s309 = scalar_lea.vmem [#allocation7], %s308
        // Predicated region
        $region49: #{tpu_custom_call.1} parent=39 // pred_check
          %p310 = pneg %p115
        $region50: #{tpu_custom_call.1} parent=39 // pred_check_branch
          %312 = sbr.rel (%p310) target = $region52
        $region51: #{tpu_custom_call.1} parent=39 // pred_region
          %313 = dma.done %s306, 64
        $region52: #{tpu_custom_call.1} parent=39 // pred_fallthru
          _
        // Predicated region
        $region53: #{tpu_custom_call.1} parent=39 // pred_check
          %p314 = pneg %p136
        $region54: #{tpu_custom_call.1} parent=39 // pred_check_branch
          %316 = sbr.rel (%p314) target = $region56
        $region55: #{tpu_custom_call.1} parent=39 // pred_region
          %317 = dma.done [#allocation9], 512
        $region56: #{tpu_custom_call.1} parent=39 // pred_fallthru
          _
        %s318 = sand.u32 %s46, 1
        %s319 = scalar_lea.sflag [#allocation3], %s318
        %s320 = sand.u32 %s46, 1
        %s321 = scalar_lea.vmem [#allocation2], %s320
        %p322 = pneg %p59
        %p323 = pneg %p56
        %s324 = sand.u32 %s26, 1
        %s325 = scalar_lea.sflag [#allocation6], %s324
        %s326 = sand.u32 %s74, 1
        %s327 = smul.addr %s326, 16
        %s328 = scalar_lea.vmem [#allocation5], %s327
        %p329 = pneg %p87
        %p330 = pneg %p84
        %s331 = sand.u32 %s26, 1
        %s332 = scalar_lea.sflag [#allocation6], %s331
        %s333 = sand.u32 %s102, 1
        %s334 = smul.addr %s333, 4
        %s335 = scalar_lea.vmem [#allocation7], %s334
        %p336 = pneg %p115
        %p337 = pneg %p112
        %p338 = pneg %p136
        %p339 = pneg %p133
        %p340 = pneg %p157
        %p341 = pneg %p154
        %p342 = pneg %p183
        %p343 = pneg %p180
        %s344 = sand.u32 %s170, 1
        %s345 = scalar_lea.sflag [#allocation4], %s344
        %s346 = sand.u32 %s170, 1
        %s347 = smul.addr %s346, 16
        %s348 = scalar_lea.vmem [#allocation10], %s347
        %s349 = smul.u32 2, %s31
        %s350 = smul.u32 2, %s31
        %p354 = scmp.eq.s32.totalorder %s31, 0
        // Predicated region
        $region57: #{tpu_custom_call.1} parent=39 // pred_check
          %p355 = pneg %p354
        $region58: #{tpu_custom_call.1} parent=39 // pred_check_branch
          %357 = sbr.rel (%p355) target = $region60
        $region59: #{tpu_custom_call.1} parent=39 // pred_region
          %vm358 = vcmask 261120
          %359 = vst.msk [vmem:[%s348] sm:$0xff] %vm358, 0.0
          %360 = vst.msk [vmem:[%s348 + $0x8] sm:$0xff] %vm358, 0.0
        $region60: #{tpu_custom_call.1} parent=39 // pred_fallthru
          _
        %v361 = vld [vmem:[#allocation8] sm:$0xff]
        %v362 = vld [vmem:[#allocation8 + $0x8] sm:$0xff]
        %v363 = vld [vmem:[#allocation8 + $0x10] sm:$0xff]
        %v364 = vld [vmem:[#allocation8 + $0x18] sm:$0xff]
        %v365 = vld [vmem:[%s4] sm:$0x1]
        %v366 = vld [vmem:[%s300] sm:$0xff]
        %v367 = vld [vmem:[%s300 + $0x8] sm:$0xff]
        %vm368 = vcmask 261120
        %v370 = vsel %vm368, %v366, 0
        %v373 = vsel %vm368, %v367, 0
        %375 = vmatprep.subr.mxu0 0.0
        %376 = vmatpush1.msra.mxu0 0.0
        %377 = vmatprep.subr.mxu0 0.0
        %378 = vmatpush1.msra.mxu0 0.0
        %379 = vmatprep.subr.mxu0 0.0
        %380 = vmatpush1.msra.mxu0 0.0
        %381 = vmatprep.subr.mxu0 0.0
        %382 = vmatpush1.msra.mxu0 0.0
        %383 = vmatprep.subr.mxu0 0.0
        %384 = vmatpush1.msra.mxu0 0.0
        %385 = vmatprep.subr.mxu0 0.0
        %386 = vmatpush1.msra.mxu0 0.0
        %387 = vmatprep.subr.mxu0 0.0
        %388 = vmatpush1.msra.mxu0 0.0
        %389 = vmatprep.subr.mxu0 0.0
        %390 = vmatpush1.msra.mxu0 0.0
        %391 = vmatprep.subr.mxu0 0.0
        %392 = vmatpush1.msra.mxu0 0.0
        %393 = vmatprep.subr.mxu0 0.0
        %394 = vmatpush1.msra.mxu0 0.0
        %395 = vmatprep.subr.mxu0 0.0
        %396 = vmatpush1.msra.mxu0 0.0
        %397 = vmatprep.subr.mxu0 0.0
        %398 = vmatpush1.msra.mxu0 0.0
        %399 = vmatprep.subr.mxu0 0.0
        %400 = vmatpush1.msra.mxu0 %v364
        %401 = vmatprep.subr.mxu0 0.0
        %402 = vmatpush1.msra.mxu0 %v363
        %403 = vmatprep.subr.mxu0 0.0
        %404 = vmatpush1.msra.mxu0 %v362
        %405 = vmatprep.subr.mxu0 0.0
        %406 = vmatpush1.msra.mxu0 %v361
        %407 = vmatprep.subr.mxu0 0.0
        %408 = vmatpush2.msra.mxu0 0.0
        %409 = vmatprep.subr.mxu0 0.0
        %410 = vmatpush2.msra.mxu0 0.0
        %411 = vmatprep.subr.mxu0 0.0
        %412 = vmatpush2.msra.mxu0 0.0
        %413 = vmatprep.subr.mxu0 0.0
        %414 = vmatpush2.msra.mxu0 0.0
        %415 = vmatprep.subr.mxu0 0.0
        %416 = vmatpush2.msra.mxu0 0.0
        %417 = vmatprep.subr.mxu0 0.0
        %418 = vmatpush2.msra.mxu0 0.0
        %419 = vmatprep.subr.mxu0 0.0
        %420 = vmatpush2.msra.mxu0 0.0
        %421 = vmatprep.subr.mxu0 0.0
        %422 = vmatpush2.msra.mxu0 0.0
        %423 = vmatprep.subr.mxu0 0.0
        %424 = vmatpush2.msra.mxu0 0.0
        %425 = vmatprep.subr.mxu0 0.0
        %426 = vmatpush2.msra.mxu0 0.0
        %427 = vmatprep.subr.mxu0 0.0
        %428 = vmatpush2.msra.mxu0 0.0
        %429 = vmatprep.subr.mxu0 0.0
        %430 = vmatpush2.msra.mxu0 0.0
        %431 = vmatprep.subr.mxu0 0.0
        %432 = vmatpush2.msra.mxu0 0.0
        %433 = vmatprep.subr.mxu0 0.0
        %434 = vmatpush2.msra.mxu0 0.0
        %435 = vmatprep.subr.mxu0 0.0
        %436 = vmatpush2.msra.mxu0 0.0
        %437 = vmatprep.subr.mxu0 0.0
        %438 = vmatpush2.msra.mxu0 0.0
        %439 = vmatprep.mubr.f32.mxu0 0.0
        %440 = vmatmul.mubr.f32.gmra.mxu0 %v370
        %v441 = vpop.f32.mrf.mxu0
        %v442 = vadd.f32 0.0, %v441
        %v443 = vpop.f32.mrf.mxu0
        %444 = vmatprep.mubr.f32.mxu0 0.0
        %445 = vmatmul.mubr.f32.gmra.mxu0 %v373
        %v446 = vpop.f32.mrf.mxu0
        %v447 = vadd.f32 0.0, %v446
        %v448 = vpop.f32.mrf.mxu0
        %449 = vdwg.mxu0
        %v451 = vlaneseq
        %v452 = vshrl.u32 %v451, 7
        %v453 = vsub.s32 0, %v452
        %v454 = vrot.slane %v365, %v453
        %v456 = vmul.f32 %v442, %v454
        %v457 = vmul.f32 %v447, %v454
        %v458 = vsel %vm368, %v456, 0.0
        %459 = vadd.xlane.f32.xlu0 %v458
        %v460 = vpop.xlane.xlu0 %459
        %v461 = vsel %vm368, %v457, 0.0
        %462 = vadd.xlane.f32.xlu0 %v461
        %v463 = vpop.xlane.xlu0 %462
        %v464 = vld [vmem:[%s291] sm:$0x1]
        %v466 = vlaneseq
        %v467 = vshrl.u32 %v466, 7
        %v468 = vsub.s32 0, %v467
        %v469 = vrot.slane %v464, %v468
        %v471 = vadd.f32 %v460, %v469
        %v472 = vadd.f32 %v463, %v469
        %vm473 = vcmp.gt.f32.partialorder %v471, 0.0
        %vm474 = vcmp.gt.f32.partialorder %v472, 0.0
        %v475 = vmul.f32 %v471, 0.2
        %v476 = vmul.f32 %v472, 0.2
        %v477 = vsel %vm473, %v471, %v475
        %v478 = vsel %vm474, %v472, %v476
        %v479 = vld [vmem:[%s309] sm:$0x3]
        %v480 = vld [vmem:[%s309 + $0x2] sm:$0x3]
        %vm481 = vnez %v479
        %vm482 = vnez %v480
        %v483 = vsel %vm481, 16843009, 0
        %v484 = vsel %vm482, 16843009, 0
        %v485 = vunpack.c.0.s8 %v483
        %v486 = vunpack.c.0.s8 %v484
        %vm487 = vcmp.ne.s32.totalorder %v485, 0
        %vm488 = vcmp.ne.s32.totalorder %v486, 0
        %v489 = vsel %vm487, %v477, -9e+15
        %v490 = vsel %vm488, %v478, -9e+15
        %vm491 = vcmask 130048
        %v492 = vsel %vm491, %v489, -inf
        %493 = vmax.xlane.f32.xlu0 %v492
        %v494 = vpop.xlane.xlu0 %493
        %v495 = vsel %vm491, %v490, -inf
        %496 = vmax.xlane.f32.xlu0 %v495
        %v497 = vpop.xlane.xlu0 %496
        %v498 = vsub.f32 %v489, %v494
        %v499 = vsub.f32 %v490, %v497
        %v500 = vmul.f32 %v498, 1.442695
        %v501 = vpow.pop %v500
        %v502 = vmul.f32 %v499, 1.442695
        %v503 = vpow.pop %v502
        %v504 = vsel %vm491, %v501, 0.0
        %505 = vadd.xlane.f32.xlu0 %v504
        %v506 = vpop.xlane.xlu0 %505
        %v507 = vsel %vm491, %v503, 0.0
        %508 = vadd.xlane.f32.xlu0 %v507
        %v509 = vpop.xlane.xlu0 %508
        %v510 = vrcp.pop %v506
        %v511 = vrcp.pop %v509
        %v512 = vmul.f32 %v501, %v510
        %v513 = vmul.f32 %v503, %v511
        %v514 = vpack.c.bf16 %v513, %v512
        %v515 = vpack.c.bf16 %v447, %v442
        %516 = vxpose.xlu0.c.b16.start [1/8] %v514, 128
        %517 = vxpose.xlu0.c.b16.cont [2/8] 0, 128
        %518 = vxpose.xlu0.c.b16.cont [3/8] 0, 128
        %519 = vxpose.xlu0.c.b16.cont [4/8] 0, 128
        %520 = vxpose.xlu0.c.b16.cont [5/8] 0, 128
        %521 = vxpose.xlu0.c.b16.cont [6/8] 0, 128
        %522 = vxpose.xlu0.c.b16.cont [7/8] 0, 128
        %523 = vxpose.xlu0.c.b16.end [8/8] 0, 128
        %v524 = vpop.trf.xlu0
        %v525 = vpop.trf.xlu0
        %v526 = vpop.trf.xlu0
        %v527 = vpop.trf.xlu0
        %v528 = vpop.trf.xlu0
        %v529 = vpop.trf.xlu0
        %v530 = vpop.trf.xlu0
        %v531 = vpop.trf.xlu0
        %v533 = vsel %vm491, %v524, 0
        %535 = vmatprep.subr.bf16.mxu0 0
        %536 = vmatpush1.bf16.msra.mxu0 0
        %537 = vmatprep.subr.bf16.mxu0 0
        %538 = vmatpush1.bf16.msra.mxu0 0
        %539 = vmatprep.subr.bf16.mxu0 0
        %540 = vmatpush1.bf16.msra.mxu0 0
        %541 = vmatprep.subr.bf16.mxu0 0
        %542 = vmatpush1.bf16.msra.mxu0 0
        %543 = vmatprep.subr.bf16.mxu0 0
        %544 = vmatpush1.bf16.msra.mxu0 0
        %545 = vmatprep.subr.bf16.mxu0 0
        %546 = vmatpush1.bf16.msra.mxu0 0
        %547 = vmatprep.subr.bf16.mxu0 0
        %548 = vmatpush1.bf16.msra.mxu0 0
        %549 = vmatprep.subr.bf16.mxu0 0
        %550 = vmatpush1.bf16.msra.mxu0 %v515
        %551 = vmatprep.subr.bf16.mxu0 0
        %552 = vmatpush2.bf16.msra.mxu0 0
        %553 = vmatprep.subr.bf16.mxu0 0
        %554 = vmatpush2.bf16.msra.mxu0 0
        %555 = vmatprep.subr.bf16.mxu0 0
        %556 = vmatpush2.bf16.msra.mxu0 0
        %557 = vmatprep.subr.bf16.mxu0 0
        %558 = vmatpush2.bf16.msra.mxu0 0
        %559 = vmatprep.subr.bf16.mxu0 0
        %560 = vmatpush2.bf16.msra.mxu0 0
        %561 = vmatprep.subr.bf16.mxu0 0
        %562 = vmatpush2.bf16.msra.mxu0 0
        %563 = vmatprep.subr.bf16.mxu0 0
        %564 = vmatpush2.bf16.msra.mxu0 0
        %565 = vmatprep.subr.bf16.mxu0 0
        %566 = vmatpush2.bf16.msra.mxu0 0
        %567 = vmatprep.mubr.bf16.mxu0 0
        %568 = vmatmul.mubr.bf16.gmra.mxu0 %v533
        %v569 = vpop.f32.mrf.mxu0
        %v570 = vadd.f32 0.0, %v569
        %v571 = vpop.f32.mrf.mxu0
        %v572 = vpop.f32.mrf.mxu0
        %v573 = vadd.f32 0.0, %v572
        %v574 = vpop.f32.mrf.mxu0
        %575 = vdwg.mxu0
        %v576 = vld [vmem:[%s348] sm:$0xff]
        %v577 = vld [vmem:[%s348 + $0x8] sm:$0xff]
        %v578 = vadd.f32 %v576, %v570
        %v579 = vadd.f32 %v577, %v573
        %580 = vst.msk [vmem:[%s348] sm:$0xff] %vm368, %v578
        %581 = vst.msk [vmem:[%s348 + $0x8] sm:$0xff] %vm368, %v579
        %s582 = sand.u32 %s170, 1
        %s583 = scalar_lea.sflag [#allocation4], %s582
        %s584 = sand.u32 %s170, 1
        %s585 = smul.addr %s584, 16
        %s586 = scalar_lea.vmem [#allocation10], %s585
        // Predicated region
        $region61: #{tpu_custom_call.1} parent=39 // pred_check
          %p587 = pneg %p180
        $region62: #{tpu_custom_call.1} parent=39 // pred_check_branch
          %589 = sbr.rel (%p587) target = $region64
        $region63: #{tpu_custom_call.1} parent=39 // pred_region
          %s591 = ssub.s32 256, 256
          %592 = vsyncadd %s583, %s591
          %s593 = smul.addr %s30, 2
          %s594 = smul.addr %s593, 128
          %s595 = scalar_lea.hbm %s5, %s594
          %s596 = sshll.u32 %s586, 4
          %s597 = int_to_ptr.vmem [resolvable:$true] %s596
          %602 = dma.vmem_to_hbm [thread:$0]  %s597, 256, %s595, %s583, 128, 128, 8
        $region64: #{tpu_custom_call.1} parent=39 // pred_fallthru
          _
      $region40: #{tpu_custom_call.1} parent=5 // pred_fallthru
        _
      %p603 = scmp.le.s32.totalorder 2, %s21
      // Predicated region
      $region65: #{tpu_custom_call.1} parent=5 // pred_check
        %p604 = pneg %p603
      $region66: #{tpu_custom_call.1} parent=5 // pred_check_branch
        %606 = sbr.rel (%p604) target = $region68
      $region67: #{tpu_custom_call.1} parent=5 // pred_region
        %s607 = ssub.s32 %s21, 2
        // Predicated region
        $region69: #{tpu_custom_call.1} parent=67 // pred_check
          %p608 = pneg %p186
        $region70: #{tpu_custom_call.1} parent=67 // pred_check_branch
          %610 = sbr.rel (%p608) target = $region72
        $region71: #{tpu_custom_call.1} parent=67 // pred_region
          %s611 = sand.u32 %s171, 1
          %s612 = scalar_lea.sflag [#allocation4], %s611
          %s613 = sand.u32 %s171, 1
          %s614 = smul.addr %s613, 16
          %s615 = scalar_lea.vmem [#allocation10], %s614
          %616 = dma.done %s612, 256
        $region72: #{tpu_custom_call.1} parent=67 // pred_fallthru
          _
      $region68: #{tpu_custom_call.1} parent=5 // pred_fallthru
        _
    $region6: #{tpu_custom_call.1} parent=1 // loop_footer
      %s25 = sadd.s32 1, %s21
    $region7: #{tpu_custom_call.1} parent=1 // loop_footer_branch
      %20 = sbr.rel target = $region3
    $region8: #{tpu_custom_call.1} parent=1 // loop_exit
      _
    %617 = vsyncpa [#allocation3], 1
    %s618 = scalar_lea.sflag [#allocation3], 1
    %619 = vsyncpa %s618, 1
    %620 = vsyncpa [#allocation6], 1
    %s621 = scalar_lea.sflag [#allocation6], 1
    %622 = vsyncpa %s621, 1
    %623 = vsyncpa [#allocation9], 1
    %624 = vsyncpa [#allocation4], 1
    %s625 = scalar_lea.sflag [#allocation4], 1
    %626 = vsyncpa %s625, 1

</llo_original>
